<compile_context>
chip_gen: v6e
topology: v6e:2x2x1
jax: 0.10.0
libtpu: 0.0.40
codegen_flags: <defaults>
</compile_context>

<pallas_src>
import functools

import numpy as np
import jax
import jax.numpy as jnp
from jax.experimental import pallas as pl
from jax.experimental.pallas import tpu as pltpu


def _round_up(x, m):
    return ((x + m - 1) // m) * m


_VMEM_LIMIT = 32 * 1024 * 1024   # safe scoped-VMEM budget across v5e / v6e / v7x


# ----------------------------- Pallas kernels -----------------------------

def _encoder_kernel(px_ref, wft_ref, bf_ref, gf_ref, *, inv_hw):
    """Tiled over HW (lane axis).  Accumulates global_feat = mean_hw(Wf^T px) + b
    into a resident (E, 1) output; per-pixel feats are never written to HBM."""
    i = pl.program_id(0)

    @pl.when(i == 0)
    def _init():
        gf_ref[...] = jnp.zeros_like(gf_ref)

    # (E, C) @ (C, TM) -> (E, TM); HW is the lane axis (lane-dense compute).
    feats_t = jnp.dot(wft_ref[...], px_ref[...], preferred_element_type=jnp.float32)
    gf_ref[...] += jnp.sum(feats_t, axis=1, keepdims=True)

    @pl.when(i == pl.num_programs(0) - 1)
    def _finalize():
        gf_ref[...] = gf_ref[...] * inv_hw + bf_ref[...]


def _decoder_kernel(gf_ref, wt_ref, b_ref, fov_ref, out_ref):
    """All classification layers fused; rank-1 structure exploited:
       out[l*C + c, n] = fov[n] * <global_feat, w_cls[l, :, c]> + b_cls[l, c].
    The (LC, E) @ (E, 1) matvec is ~LC*E MACs -> negligible to recompute per
    tile (a resident scratch would break under megacore grid partitioning)."""
    row = jnp.dot(wt_ref[...], gf_ref[...], preferred_element_type=jnp.float32)  # (LC, 1)
    out_ref[...] = row * fov_ref[...] + b_ref[...]                               # (LC, TN) lane-dense


def _bilinear_thresh_kernel(m_ref, wy_ref, wxt_ref, out_ref):
    # Exact separable bilinear interpolation (align_corners=False):
    #   up = Wy @ M @ Wx^T ; out = float(up > 0.5).  Kept in f32 so the 0.5
    # threshold matches the torch reference bit-for-bit.
    tmp = jnp.dot(wy_ref[...], m_ref[...], preferred_element_type=jnp.float32)
    up = jnp.dot(tmp, wxt_ref[...], preferred_element_type=jnp.float32)
    out_ref[...] = (up > 0.5).astype(jnp.float32)


# ----------------------------- Pallas wrappers -----------------------------

def encoder_global_feat(pixels_c_hw, wft, bf_col):
    """pixels (C, HW) -> global feature (E, 1)."""
    C, HW = pixels_c_hw.shape
    E = wft.shape[0]
    TM = min(8192, _round_up(HW, 128))
    HWp = _round_up(HW, TM)
    px = pixels_c_hw.astype(jnp.bfloat16)
    if HWp != HW:
        px = jnp.pad(px, ((0, 0), (0, HWp - HW)))   # zero pad: contributes nothing to the sum

    kernel = functools.partial(_encoder_kernel, inv_hw=1.0 / float(HW))
    return pl.pallas_call(
        kernel,
        out_shape=jax.ShapeDtypeStruct((E, 1), jnp.float32),
        grid=(HWp // TM,),
        in_specs=[pl.BlockSpec((C, TM), lambda i: (0, i)),
                  pl.BlockSpec((E, C), lambda i: (0, 0)),
                  pl.BlockSpec((E, 1), lambda i: (0, 0))],
        out_specs=pl.BlockSpec((E, 1), lambda i: (0, 0)),      # resident accumulator
        compiler_params=pltpu.CompilerParams(
            dimension_semantics=("arbitrary",),                # reduction over HW tiles
            vmem_limit_bytes=_VMEM_LIMIT),
    )(px, wft, bf_col)


def decoder_classify(gf_col, wt_all, b_col, fov_row):
    """global_feat (E,1), fused weights (L*C, E), bias (L*C, 1), fov (1, N)
       -> logits (L*C, N) with the voxel axis lane-dense."""
    LC, E = wt_all.shape
    N = fov_row.shape[1]
    TN = min(16384, _round_up(N, 128))
    Np = _round_up(N, TN)
    fov = fov_row
    if Np != N:
        fov = jnp.pad(fov, ((0, 0), (0, Np - N)))

    gf_bf16 = gf_col.astype(jnp.bfloat16)                      # one-time cast in the wrapper

    out = pl.pallas_call(
        _decoder_kernel,
        out_shape=jax.ShapeDtypeStruct((LC, Np), jnp.float32),
        grid=(Np // TN,),
        in_specs=[pl.BlockSpec((E, 1), lambda j: (0, 0)),
                  pl.BlockSpec((LC, E), lambda j: (0, 0)),
                  pl.BlockSpec((LC, 1), lambda j: (0, 0)),
                  pl.BlockSpec((1, TN), lambda j: (0, j))],
        out_specs=pl.BlockSpec((LC, TN), lambda j: (0, j)),
        compiler_params=pltpu.CompilerParams(
            dimension_semantics=("parallel",),                 # independent voxel tiles (v7x megacore)
            vmem_limit_bytes=_VMEM_LIMIT),
    )(gf_bf16, wt_all, b_col, fov)
    return out[:, :N] if Np != N else out


def bilinear_upsample_threshold(mask2d, wy, wxt):
    Ho, Hi = wy.shape
    Wi, Wo = wxt.shape
    return pl.pallas_call(
        _bilinear_thresh_kernel,
        out_shape=jax.ShapeDtypeStruct((Ho, Wo), jnp.float32),
        grid=(1,),
        in_specs=[pl.BlockSpec((Hi, Wi), lambda i: (0, 0)),
                  pl.BlockSpec((Ho, Hi), lambda i: (0, 0)),
                  pl.BlockSpec((Wi, Wo), lambda i: (0, 0))],
        out_specs=pl.BlockSpec((Ho, Wo), lambda i: (0, 0)),
        compiler_params=pltpu.CompilerParams(vmem_limit_bytes=_VMEM_LIMIT),
    )(mask2d, wy, wxt)


# ----------------------------- glue / parameters -----------------------------

def _interp_matrix(in_size, out_size):
    """Row-interpolation matrix matching torch F.interpolate bilinear, align_corners=False."""
    scale = in_size / out_size
    i = np.arange(out_size)
    src = (i + 0.5) * scale - 0.5
    src = np.maximum(src, 0.0)                 # torch clamps negative source idx to 0
    i0 = np.minimum(np.floor(src).astype(np.int64), in_size - 1)
    i1 = np.minimum(i0 + 1, in_size - 1)
    w1 = (src - i0).astype(np.float32)
    w0 = 1.0 - w1
    W = np.zeros((out_size, in_size), dtype=np.float32)
    W[i, i0] += w0
    W[i, i1] += w1
    return W


class MARE:
    """Pallas re-implementation of MARE.forward with synthetic encoder/decoder params."""

    def __init__(self, embed_dims, scene_size, view_scales, volume_scale, num_classes,
                 num_layers=3, img_channels=3):
        self.volume_scale = volume_scale
        self.num_classes = num_classes
        self.scene_size = scene_size
        self.num_layers = num_layers

        # TODO(synk): the reference `encoder` and `MAREDecoder` internals are not defined
        # in the provided source; their parameters are deterministic synthetic stand-ins.
        k = jax.random.PRNGKey(0)
        k0, k1, k3, k4 = jax.random.split(k, 4)
        self.w_feat = 0.1 * jax.random.normal(k0, (img_channels, embed_dims), jnp.float32)
        self.b_feat = 0.1 * jax.random.normal(k1, (embed_dims,), jnp.float32)
        self.w_cls = 0.1 * jax.random.normal(k3, (num_layers, embed_dims, num_classes), jnp.float32)
        self.b_cls = 0.1 * jax.random.normal(k4, (num_layers, num_classes), jnp.float32)

        # Kernel-layout copies: transposed so HW / N are lane axes, bf16 for the MXU.
        LC = num_layers * num_classes
        self.wft = jnp.transpose(self.w_feat).astype(jnp.bfloat16)                    # (E, C)
        self.bf_col = self.b_feat[:, None]                                            # (E, 1)
        self.wt_cls = (jnp.transpose(self.w_cls, (0, 2, 1))
                       .reshape(LC, embed_dims).astype(jnp.bfloat16))                 # (L*C, E)
        self.b_col = self.b_cls.reshape(LC, 1).astype(jnp.float32)                    # (L*C, 1)

        # Exact bilinear-interpolation operators for the (X, Y) -> (256, 256) resize.
        X, Y, _ = scene_size
        self.wy = jnp.asarray(_interp_matrix(X, 256))        # (256, X)
        self.wxt = jnp.asarray(_interp_matrix(Y, 256).T)     # (Y, 256)

    def __call__(self, inputs):
        img = inputs['img']                                   # (1, C, H, W), NCHW
        _, C, H, W = img.shape
        pixels = img[0].reshape(C, H * W)                     # (C, HW): no transpose pass

        # Encoder stand-in: global feature only (feats never materialized in HBM).
        global_feat = encoder_global_feat(pixels, self.wft, self.bf_col)   # (E, 1)

        depth = inputs['depth']
        K = inputs['cam_K']
        E = inputs['cam_pose']
        voxel_origin = inputs['voxel_origin']
        projected_pix = inputs[f'projected_pix_{self.volume_scale}']
        fov_mask = inputs[f'fov_mask_{self.volume_scale}']
        _aux = (inputs['sequence'][0], inputs['frame_id'][0],
                depth, K, E, voxel_origin, projected_pix)     # decoder aux inputs (stand-in)

        X, Y, Z = self.scene_size
        N = X * Y * Z
        fov_row = fov_mask[0].astype(jnp.float32).reshape(1, N)

        # Decoder heads: all L layers fused, output (L*C, N) voxel-lane-dense.
        logits_t = decoder_classify(global_feat, self.wt_cls, self.b_col, fov_row)
        Cc = self.num_classes
        outs = [logits_t[l * Cc:(l + 1) * Cc].reshape(Cc, X, Y, Z)[None]
                for l in range(self.num_layers)]              # each (1, C, X, Y, Z), no transpose

        # BEV visibility: any visible voxel along Z (tiny; left to XLA).
        visible_bev_mask = jnp.any(fov_mask[0].reshape(X, Y, Z), axis=-1).astype(jnp.float32)

        # Exact torch post-processing: bilinear(256,256, align_corners=False) -> (>0.5).float()
        visible_mask = bilinear_upsample_threshold(visible_bev_mask, self.wy, self.wxt)

        return {
            'ssc_logits': outs[-1],
            'aux_outputs': outs,
            'visible_mask': visible_mask,
        }


# ----------------------------- demo -----------------------------

def _reference_forward(model, inputs):
    """Pure-JAX (XLA, f32) reference of the same synthetic forward."""
    img = inputs['img']
    _, C, H, W = img.shape
    px = jnp.transpose(img[0], (1, 2, 0)).reshape(H * W, C)
    feats = px @ model.w_feat + model.b_feat[None, :]
    gf = feats.mean(axis=0)
    X, Y, Z = model.scene_size
    fov = inputs[f'fov_mask_{model.volume_scale}'][0].astype(jnp.float32)
    scene = fov[:, None] * gf[None, :]
    outs = []
    for l in range(model.num_layers):
        lg = scene @ model.w_cls[l] + model.b_cls[l][None, :]
        outs.append(jnp.transpose(lg.reshape(X, Y, Z, model.num_classes), (3, 0, 1, 2))[None])
    bev = jnp.any(fov.reshape(X, Y, Z) > 0, axis=-1).astype(jnp.float32)
    up = model.wy @ bev @ model.wxt
    vis = (up > 0.5).astype(jnp.float32)
    return outs, vis


if __name__ == "__main__":
    key = jax.random.PRNGKey(0)
    kimg, kdep, kfov = jax.random.split(key, 3)

    scene_size = (16, 16, 4)            # (X, Y, Z)
    n_vox = scene_size[0] * scene_size[1] * scene_size[2]
    volume_scale = 2

    inputs = {
        'img': jax.random.normal(kimg, (1, 3, 16, 16), jnp.float32),          # NCHW
        'depth': jax.random.uniform(kdep, (1, 16, 16), jnp.float32) * 50.0,
        'cam_K': jnp.eye(3, dtype=jnp.float32)[None],
        'cam_pose': jnp.eye(4, dtype=jnp.float32)[None],
        'voxel_origin': jnp.zeros((1, 3), jnp.float32),
        f'projected_pix_{volume_scale}': jnp.zeros((1, n_vox, 2), jnp.int32),
        f'fov_mask_{volume_scale}': jax.random.bernoulli(kfov, 0.5, (1, n_vox)),
        'sequence': ['00'],
        'frame_id': ['000000'],
    }

    model = MARE(embed_dims=32, scene_size=scene_size, view_scales=[1],
                 volume_scale=volume_scale, num_classes=8, num_layers=2)

    out = model(inputs)
    jax.block_until_ready(out)

    assert out['ssc_logits'].shape == (1, 8, 16, 16, 4)
    assert out['visible_mask'].shape == (256, 256)
    assert len(out['aux_outputs']) == 2

    # Correctness against pure-JAX f32 reference (bf16 matmul inputs -> loose tol).
    ref_outs, ref_vis = _reference_forward(model, inputs)
    assert np.allclose(np.asarray(out['ssc_logits']), np.asarray(ref_outs[-1]),
                       rtol=5e-2, atol=2.5e-2)
    assert np.array_equal(np.asarray(out['visible_mask']), np.asarray(ref_vis))

    print("KERNEL_OK")
</pallas_src>

<mosaic_0001>
module attributes {stable_mosaic.version = 11 : i64} {
  func.func @_encoder_kernel(%arg0: i32, %arg1: memref<3x256xbf16, #tpu.memory_space<vmem>>, %arg2: memref<32x3xbf16, #tpu.memory_space<vmem>>, %arg3: memref<32x1xf32, #tpu.memory_space<vmem>>, %arg4: memref<32x1xf32, #tpu.memory_space<vmem>>) attributes {dimension_semantics = [#tpu.dimension_semantics<arbitrary>], iteration_bounds = array<i64: 1>, scalar_prefetch = 0 : i64, scratch_operands = 0 : i64, tpu.core_type = #tpu.core_type<tc>, window_params = [{transform_indices = @transform_0, window_bounds = array<i64: 3, 256>}, {pipeline_mode = #tpu.pipeline_mode<synchronous>, transform_indices = @transform_1, window_bounds = array<i64: 32, 3>}, {pipeline_mode = #tpu.pipeline_mode<synchronous>, transform_indices = @transform_2, window_bounds = array<i64: 32, 1>}, {pipeline_mode = #tpu.pipeline_mode<synchronous>, transform_indices = @transform_3, window_bounds = array<i64: 32, 1>}]} {
    %c0_i32 = arith.constant 0 : i32
    %0 = arith.cmpi eq, %arg0, %c0_i32 : i32
    %1 = arith.extui %0 : i1 to i32
    %c0_i32_0 = arith.constant 0 : i32
    %2 = arith.cmpi ne, %1, %c0_i32_0 : i32
    scf.if %2 {
      %cst_11 = arith.constant 0.000000e+00 : f32
      %14 = vector.broadcast %cst_11 : f32 to vector<32x1xf32>
      %c0_12 = arith.constant 0 : index
      %c0_13 = arith.constant 0 : index
      %15 = vector.load %arg4[%c0_12, %c0_13] : memref<32x1xf32, #tpu.memory_space<vmem>>, vector<32x1xf32>
      tpu.vector_store %arg4[%c0_12, %c0_13], %14 {strides = array<i32>} : memref<32x1xf32, #tpu.memory_space<vmem>>, vector<32x1xf32>,
    } else {
    }
    %c0 = arith.constant 0 : index
    %c0_1 = arith.constant 0 : index
    %3 = vector.load %arg2[%c0, %c0_1] : memref<32x3xbf16, #tpu.memory_space<vmem>>, vector<32x3xbf16>
    %c0_2 = arith.constant 0 : index
    %c0_3 = arith.constant 0 : index
    %4 = vector.load %arg1[%c0_2, %c0_3] : memref<3x256xbf16, #tpu.memory_space<vmem>>, vector<3x256xbf16>
    %cst = arith.constant dense<0.000000e+00> : vector<32x256xf32>
    %5 = tpu.matmul %3, %4, %cst {dimension_numbers = #tpu.dot_dimension_numbers<[1], [0], [0], [1], [0, 0, 1, 1], [], []>} : vector<32x3xbf16>, vector<3x256xbf16>, vector<32x256xf32> -> vector<32x256xf32>
    %c0_4 = arith.constant 0 : index
    %c0_5 = arith.constant 0 : index
    %6 = vector.load %arg4[%c0_4, %c0_5] : memref<32x1xf32, #tpu.memory_space<vmem>>, vector<32x1xf32>
    %cst_6 = arith.constant dense<0.000000e+00> : vector<32xf32>
    %7 = vector.multi_reduction <add>, %5, %cst_6 [1] : vector<32x256xf32> to vector<32xf32>
    %8 = vector.shape_cast %7 : vector<32xf32> to vector<32x1xf32>
    %9 = arith.addf %6, %8 : vector<32x1xf32>
    %c0_7 = arith.constant 0 : index
    %c0_8 = arith.constant 0 : index
    %10 = vector.load %arg4[%c0_7, %c0_8] : memref<32x1xf32, #tpu.memory_space<vmem>>, vector<32x1xf32>
    tpu.vector_store %arg4[%c0_7, %c0_8], %9 {strides = array<i32>} : memref<32x1xf32, #tpu.memory_space<vmem>>, vector<32x1xf32>,
    %c0_i32_9 = arith.constant 0 : i32
    %11 = arith.cmpi eq, %arg0, %c0_i32_9 : i32
    %12 = arith.extui %11 : i1 to i32
    %c0_i32_10 = arith.constant 0 : i32
    %13 = arith.cmpi ne, %12, %c0_i32_10 : i32
    scf.if %13 {
      %c0_11 = arith.constant 0 : index
      %c0_12 = arith.constant 0 : index
      %14 = vector.load %arg4[%c0_11, %c0_12] : memref<32x1xf32, #tpu.memory_space<vmem>>, vector<32x1xf32>
      %cst_13 = arith.constant 3.906250e-03 : f32
      %15 = vector.broadcast %cst_13 : f32 to vector<32x1xf32>
      %16 = arith.mulf %14, %15 : vector<32x1xf32>
      %c0_14 = arith.constant 0 : index
      %c0_15 = arith.constant 0 : index
      %17 = vector.load %arg3[%c0_14, %c0_15] : memref<32x1xf32, #tpu.memory_space<vmem>>, vector<32x1xf32>
      %18 = arith.addf %16, %17 : vector<32x1xf32>
      %c0_16 = arith.constant 0 : index
      %c0_17 = arith.constant 0 : index
      %19 = vector.load %arg4[%c0_16, %c0_17] : memref<32x1xf32, #tpu.memory_space<vmem>>, vector<32x1xf32>
      tpu.vector_store %arg4[%c0_16, %c0_17], %18 {strides = array<i32>} : memref<32x1xf32, #tpu.memory_space<vmem>>, vector<32x1xf32>,
    } else {
    }
    return
  }
  func.func @transform_0(%arg0: i32) -> (i32, i32) {
    %c0_i32 = arith.constant 0 : i32
    %c0_i32_0 = arith.constant 0 : i32
    return %c0_i32, %arg0 : i32, i32
  }
  func.func @transform_1(%arg0: i32) -> (i32, i32) {
    %c0_i32 = arith.constant 0 : i32
    %c0_i32_0 = arith.constant 0 : i32
    %c0_i32_1 = arith.constant 0 : i32
    return %c0_i32, %c0_i32_0 : i32, i32
  }
  func.func @transform_2(%arg0: i32) -> (i32, i32) {
    %c0_i32 = arith.constant 0 : i32
    %c0_i32_0 = arith.constant 0 : i32
    %c0_i32_1 = arith.constant 0 : i32
    return %c0_i32, %c0_i32_0 : i32, i32
  }
  func.func @transform_3(%arg0: i32) -> (i32, i32) {
    %c0_i32 = arith.constant 0 : i32
    %c0_i32_0 = arith.constant 0 : i32
    %c0_i32_1 = arith.constant 0 : i32
    return %c0_i32, %c0_i32_0 : i32, i32
  }
}

</mosaic_0001>

<llo_original>
// kernel: tpu_custom_call.1
$region0: #{tpu_custom_call.1}
  #allocation0 [shape = 'u32[]', space=smem, size = 0x4, offset = 0x4, fixed_abs, tag = 'smem constant byte address 0x4 - core index']
  #allocation1 [shape = 'u32[144,128]{1,0:T(1,128)}', space=vmem, size = 0x12000, scoped, tag = 'internal scratch']
  %s0 = inlined_call_operand.vmem [shape: bf16[3,256], index: 0, kind: input, shape index: {}]
  %s1 = inlined_call_operand.vmem [shape: bf16[32,3], index: 1, kind: input, shape index: {}]
  %s2 = inlined_call_operand.vmem [shape: f32[32,1], index: 2, kind: input, shape index: {}]
  %s3 = inlined_call_operand.vmem [shape: f32[32,1], index: 3, kind: output, shape index: {}]
  %s4 = sld [smem:[#allocation0]]
  $region30: #{tpu_custom_call.1} parent=0
    _
  %s6 = ssub.s32 1, %s4
  %s7 = scalar_select 0, %s6, %s4
  // Predicated region
  $region2: #{tpu_custom_call.1} parent=0 // pred_check
    _
  $region3: #{tpu_custom_call.1} parent=0 // pred_check_branch
    %9 = sbr.rel (0) target = $region5
  $region4: #{tpu_custom_call.1} parent=0 // pred_region
    _
  $region5: #{tpu_custom_call.1} parent=0 // pred_fallthru
    _
  // Predicated region
  $region6: #{tpu_custom_call.1} parent=0 // pred_check
    _
  $region7: #{tpu_custom_call.1} parent=0 // pred_check_branch
    %11 = sbr.rel (0) target = $region9
  $region8: #{tpu_custom_call.1} parent=0 // pred_region
    _
  $region9: #{tpu_custom_call.1} parent=0 // pred_fallthru
    _
  // Predicated region
  $region10: #{tpu_custom_call.1} parent=0 // pred_check
    _
  $region11: #{tpu_custom_call.1} parent=0 // pred_check_branch
    %13 = sbr.rel (0) target = $region13
  $region12: #{tpu_custom_call.1} parent=0 // pred_region
    _
  $region13: #{tpu_custom_call.1} parent=0 // pred_fallthru
    _
  %p15 = scmp.eq.s32.totalorder 0, 0
  // Predicated region
  $region14: #{tpu_custom_call.1} parent=0 // pred_check
    %p16 = pneg %p15
  $region15: #{tpu_custom_call.1} parent=0 // pred_check_branch
    %18 = sbr.rel (%p16) target = $region17
  $region16: #{tpu_custom_call.1} parent=0 // pred_region
    %vm19 = vcmask 7168
    %20 = vst.msk [vmem:[%s3] sm:$0xff] %vm19, 0.0
    %21 = vst.msk [vmem:[%s3 + $0x8] sm:$0xff] %vm19, 0.0
    %22 = vst.msk [vmem:[%s3 + $0x10] sm:$0xff] %vm19, 0.0
    %23 = vst.msk [vmem:[%s3 + $0x18] sm:$0xff] %vm19, 0.0
  $region17: #{tpu_custom_call.1} parent=0 // pred_fallthru
    _
  %v24 = vld [vmem:[%s1] sm:$0xf]
  %v25 = vld [vmem:[%s1 + $0x4] sm:$0xf]
  %v26 = vld [vmem:[%s1 + $0x8] sm:$0xf]
  %v27 = vld [vmem:[%s1 + $0xc] sm:$0xf]
  %v28 = vld [vmem:[%s0] sm:$0xf]
  %v33 = vunpack.c.l.b16 %v24
  %v34 = vunpack.c.l.b16 %v25
  %v35 = vunpack.c.l.b16 %v26
  %v36 = vunpack.c.l.b16 %v27
  %v37 = vpack.c.b16 %v34, %v33
  %v38 = vpack.c.b16 %v36, %v35
  %v41 = vunpack.c.l.s4 1983009808
  %v42 = vunpack.c.0.s8 %v41
  %v43 = vlaneseq
  %v44 = vshrl.u32 %v43, 7
  %v45 = vsub.s32 %v42, %v44
  %v46 = vrot.slane %v28, %v45
  %v47 = vcombine.high %v46, %v46
  %vm48 = vcmask 23552
  %v50 = vsel %vm48, %v37, 0
  %v53 = vsel %vm48, %v38, 0
  %vm55 = vcmask 1040384
  %vm56 = vcmask 1041408
  %v57 = vsel %vm55, 4294967295, 65535
  %v58 = vsel %vm56, %v57, 0
  %v60 = vand.u32 %v46, %v58
  %v63 = vand.u32 %v47, %v58
  %65 = vmatprep.subr.bf16.mxu0 0
  %66 = vmatpush1.bf16.msra.mxu0 0
  %67 = vmatprep.subr.bf16.mxu0 0
  %68 = vmatpush1.bf16.msra.mxu0 0
  %69 = vmatprep.subr.bf16.mxu0 0
  %70 = vmatpush1.bf16.msra.mxu0 0
  %71 = vmatprep.subr.bf16.mxu0 0
  %72 = vmatpush1.bf16.msra.mxu0 0
  %73 = vmatprep.subr.bf16.mxu0 0
  %74 = vmatpush1.bf16.msra.mxu0 0
  %75 = vmatprep.subr.bf16.mxu0 0
  %76 = vmatpush1.bf16.msra.mxu0 0
  %77 = vmatprep.subr.bf16.mxu0 0
  %78 = vmatpush1.bf16.msra.mxu0 0
  %79 = vmatprep.subr.bf16.mxu0 %v63
  %80 = vmatpush1.bf16.msra.mxu0 %v60
  %81 = vmatprep.subr.bf16.mxu0 0
  %82 = vmatpush2.bf16.msra.mxu0 0
  %83 = vmatprep.subr.bf16.mxu0 0
  %84 = vmatpush2.bf16.msra.mxu0 0
  %85 = vmatprep.subr.bf16.mxu0 0
  %86 = vmatpush2.bf16.msra.mxu0 0
  %87 = vmatprep.subr.bf16.mxu0 0
  %88 = vmatpush2.bf16.msra.mxu0 0
  %89 = vmatprep.subr.bf16.mxu0 0
  %90 = vmatpush2.bf16.msra.mxu0 0
  %91 = vmatprep.subr.bf16.mxu0 0
  %92 = vmatpush2.bf16.msra.mxu0 0
  %93 = vmatprep.subr.bf16.mxu0 0
  %94 = vmatpush2.bf16.msra.mxu0 0
  %95 = vmatprep.subr.bf16.mxu0 0
  %96 = vmatpush2.bf16.msra.mxu0 0
  %97 = vmatprep.mubr.bf16.mxu0 0
  %98 = vmatmul.mubr.bf16.gmra.mxu0 %v50
  %v99 = vpop.f32.mrf.mxu0
  %v100 = vadd.f32 0.0, %v99
  %v101 = vpop.f32.mrf.mxu0
  %v102 = vadd.f32 0.0, %v101
  %v103 = vpop.f32.mrf.mxu0
  %v104 = vadd.f32 0.0, %v103
  %v105 = vpop.f32.mrf.mxu0
  %v106 = vadd.f32 0.0, %v105
  %107 = vmatprep.mubr.bf16.mxu0 0
  %108 = vmatmul.mubr.bf16.gmra.mxu0 %v53
  %v109 = vpop.f32.mrf.mxu0
  %v110 = vadd.f32 0.0, %v109
  %v111 = vpop.f32.mrf.mxu0
  %v112 = vadd.f32 0.0, %v111
  %v113 = vpop.f32.mrf.mxu0
  %v114 = vadd.f32 0.0, %v113
  %v115 = vpop.f32.mrf.mxu0
  %v116 = vadd.f32 0.0, %v115
  %117 = vdwg.mxu0
  %v118 = vld [vmem:[%s3] sm:$0xff]
  %v119 = vld [vmem:[%s3 + $0x8] sm:$0xff]
  %v120 = vld [vmem:[%s3 + $0x10] sm:$0xff]
  %v121 = vld [vmem:[%s3 + $0x18] sm:$0xff]
  %v122 = vadd.f32 %v100, %v102
  %123 = vadd.xlane.f32.xlu0 %v122
  %v124 = vpop.xlane.xlu0 %123
  %v125 = vadd.f32 %v104, %v106
  %126 = vadd.xlane.f32.xlu0 %v125
  %v127 = vpop.xlane.xlu0 %126
  %v128 = vadd.f32 %v110, %v112
  %129 = vadd.xlane.f32.xlu0 %v128
  %v130 = vpop.xlane.xlu0 %129
  %v131 = vadd.f32 %v114, %v116
  %132 = vadd.xlane.f32.xlu0 %v131
  %v133 = vpop.xlane.xlu0 %132
  %v134 = vadd.f32 %v118, %v124
  %v135 = vadd.f32 %v119, %v127
  %v136 = vadd.f32 %v120, %v130
  %v137 = vadd.f32 %v121, %v133
  %vm138 = vcmask 7168
  %139 = vst.msk [vmem:[%s3] sm:$0xff] %vm138, %v134
  %140 = vst.msk [vmem:[%s3 + $0x8] sm:$0xff] %vm138, %v135
  %141 = vst.msk [vmem:[%s3 + $0x10] sm:$0xff] %vm138, %v136
  %142 = vst.msk [vmem:[%s3 + $0x18] sm:$0xff] %vm138, %v137
  // Predicated region
  $region18: #{tpu_custom_call.1} parent=0 // pred_check
    %p143 = pneg %p15
  $region19: #{tpu_custom_call.1} parent=0 // pred_check_branch
    %145 = sbr.rel (%p143) target = $region21
  $region20: #{tpu_custom_call.1} parent=0 // pred_region
    %v146 = vld [vmem:[%s3] sm:$0xff]
    %v147 = vld [vmem:[%s3 + $0x8] sm:$0xff]
    %v148 = vld [vmem:[%s3 + $0x10] sm:$0xff]
    %v149 = vld [vmem:[%s3 + $0x18] sm:$0xff]
    %v150 = vmul.f32 %v146, 0.00390625
    %v151 = vmul.f32 %v147, 0.00390625
    %v152 = vmul.f32 %v148, 0.00390625
    %v153 = vmul.f32 %v149, 0.00390625
    %v154 = vld [vmem:[%s2] sm:$0xff]
    %v155 = vld [vmem:[%s2 + $0x8] sm:$0xff]
    %v156 = vld [vmem:[%s2 + $0x10] sm:$0xff]
    %v157 = vld [vmem:[%s2 + $0x18] sm:$0xff]
    %v158 = vadd.f32 %v150, %v154
    %v159 = vadd.f32 %v151, %v155
    %v160 = vadd.f32 %v152, %v156
    %v161 = vadd.f32 %v153, %v157
    %162 = vst.msk [vmem:[%s3] sm:$0xff] %vm138, %v158
    %163 = vst.msk [vmem:[%s3 + $0x8] sm:$0xff] %vm138, %v159
    %164 = vst.msk [vmem:[%s3 + $0x10] sm:$0xff] %vm138, %v160
    %165 = vst.msk [vmem:[%s3 + $0x18] sm:$0xff] %vm138, %v161
  $region21: #{tpu_custom_call.1} parent=0 // pred_fallthru
    _
  // Predicated region
  $region22: #{tpu_custom_call.1} parent=0 // pred_check
    _
  $region23: #{tpu_custom_call.1} parent=0 // pred_check_branch
    %167 = sbr.rel (0) target = $region25
  $region24: #{tpu_custom_call.1} parent=0 // pred_region
    _
  $region25: #{tpu_custom_call.1} parent=0 // pred_fallthru
    _
  // Predicated region
  $region26: #{tpu_custom_call.1} parent=0 // pred_check
    _
  $region27: #{tpu_custom_call.1} parent=0 // pred_check_branch
    %169 = sbr.rel (0) target = $region29
  $region28: #{tpu_custom_call.1} parent=0 // pred_region
    _
  $region29: #{tpu_custom_call.1} parent=0 // pred_fallthru
    _

</llo_original>
